<compile_context>
chip_gen: v7x
topology: tpu7x:2x2x1
jax: 0.10.0
libtpu: 0.0.40
codegen_flags: <defaults>
</compile_context>

<pallas_src>
import functools

import jax
import jax.numpy as jnp
from jax.experimental import pallas as pl
from jax.experimental.pallas import tpu as pltpu


def mlp_kernel(x_ref, wfc_ref, bfc_ref, wproj_ref, bproj_ref, o_ref, *,
               th, compute_dtype):
    TM = x_ref.shape[0]
    C = o_ref.shape[1]
    H = wfc_ref.shape[1]
    num_chunks = H // th

    x = x_ref[...]                                   # (TM, C), loaded once
    acc = jnp.zeros((TM, C), jnp.float32)            # c_proj accumulator

    c0 = jnp.asarray(0.7978845608028654, compute_dtype)   # sqrt(2/pi)
    c1 = jnp.asarray(0.044715, compute_dtype)
    half = jnp.asarray(0.5, compute_dtype)
    one = jnp.asarray(1.0, compute_dtype)

    # Static loop over H chunks: avoids materializing the (TM, 4C) f32
    # intermediate; all weight-ref slices are static (multiple-of-128 offsets).
    for j in range(num_chunks):
        lo = j * th
        # ---- c_fc chunk: (TM, C) @ (C, TH), f32 accumulation on the MXU ----
        h = jnp.dot(x, wfc_ref[:, lo:lo + th],
                    preferred_element_type=jnp.float32)
        h = h + bfc_ref[:, lo:lo + th].astype(jnp.float32)
        h = h.astype(compute_dtype)

        # ---- GELU, tanh approximation (matches nn.GELU(approximate='tanh'))
        inner = c0 * (h + c1 * (h * h * h))
        g = half * h * (one + jnp.tanh(inner))

        # ---- c_proj chunk: (TM, TH) @ (TH, C), accumulate in f32 ----
        acc = acc + jnp.dot(g.astype(wproj_ref.dtype),
                            wproj_ref[lo:lo + th, :],
                            preferred_element_type=jnp.float32)

    acc = acc + bproj_ref[...].astype(jnp.float32)
    o_ref[...] = acc.astype(o_ref.dtype)


def _default_vmem_limit_bytes():
    # ~96 MiB on v5e/v6e (128 MiB physical VMEM), ~48 MiB on v7x (64 MiB).
    try:
        info = pltpu.get_tpu_info()
        cap = getattr(info, "vmem_capacity_bytes", None)
        if cap:
            return int(cap) * 3 // 4
    except Exception:
        pass
    return 64 * 1024 * 1024


def _pick_tm(m_total, tm, dtype):
    """Row-tile size: full M if small, otherwise an MXU-friendly multiple."""
    if m_total <= tm:
        return m_total
    if tm >= 256:
        return (tm // 256) * 256          # 256-aligned for the 256x256 MXU
    mult = 16 if jnp.dtype(dtype).itemsize < 4 else 8   # bf16 sublane packing
    return max(mult, (tm // mult) * mult)


def _pick_th(h_total, target):
    """Hidden-chunk size: multiple of 128 that divides H, <= target."""
    if h_total <= target:
        return h_total
    t = (target // 128) * 128
    while t >= 128:
        if h_total % t == 0:
            return t
        t -= 128
    for d in range(min(target, h_total), 0, -1):
        if h_total % d == 0:
            return d
    return h_total


def mlp_pallas(x, w_fc, b_fc, w_proj, b_proj, *, tm=512, th=512,
               vmem_limit_bytes=None):
    """x: (B, T, C); w_fc: (C, 4C); b_fc: (4C,); w_proj: (4C, C); b_proj: (C,).

    On v5e prefer tm=256 (single vst slot, smaller scoped VMEM).
    """
    B, T, C = x.shape
    H = w_fc.shape[1]
    assert w_fc.shape == (C, H) and w_proj.shape == (H, C)
    assert b_fc.shape == (H,) and b_proj.shape == (C,)
    M = B * T
    x2 = x.reshape(M, C)

    TM = _pick_tm(M, tm, x.dtype)
    TH = _pick_th(H, th)
    grid = (pl.cdiv(M, TM),)

    # bf16 epilogue on bf16 activations (v6e/v7x bf16 VPU/EUP); f32 otherwise.
    compute_dtype = jnp.bfloat16 if x.dtype == jnp.bfloat16 else jnp.float32
    kernel = functools.partial(mlp_kernel, th=TH, compute_dtype=compute_dtype)

    if vmem_limit_bytes is None:
        vmem_limit_bytes = _default_vmem_limit_bytes()

    itemsize = jnp.dtype(x.dtype).itemsize
    cost = pl.CostEstimate(
        flops=4 * M * C * H,                       # two matmuls, 2*M*C*H each
        transcendentals=M * H,                     # tanh per hidden element
        bytes_accessed=(
            M * C * itemsize                       # x
            + C * H * jnp.dtype(w_fc.dtype).itemsize
            + H * jnp.dtype(b_fc.dtype).itemsize
            + H * C * jnp.dtype(w_proj.dtype).itemsize
            + C * jnp.dtype(b_proj.dtype).itemsize
            + M * C * itemsize                     # out
        ),
    )

    def build(weight_pipeline_mode):
        kw = {}
        if weight_pipeline_mode is not None:
            kw = {"pipeline_mode": weight_pipeline_mode}
        return pl.pallas_call(
            kernel,
            out_shape=jax.ShapeDtypeStruct((M, C), x.dtype),
            grid=grid,
            in_specs=[
                pl.BlockSpec((TM, C), lambda i: (i, 0)),        # x, streamed
                pl.BlockSpec((C, H), lambda i: (0, 0), **kw),   # w_fc, resident
                pl.BlockSpec((1, H), lambda i: (0, 0), **kw),   # b_fc, resident
                pl.BlockSpec((H, C), lambda i: (0, 0), **kw),   # w_proj, resident
                pl.BlockSpec((1, C), lambda i: (0, 0), **kw),   # b_proj, resident
            ],
            out_specs=pl.BlockSpec((TM, C), lambda i: (i, 0)),
            compiler_params=pltpu.CompilerParams(
                dimension_semantics=("parallel",),              # megacore
                vmem_limit_bytes=vmem_limit_bytes),
            cost_estimate=cost,
        )

    args = (x2, w_fc, b_fc.reshape(1, H), w_proj, b_proj.reshape(1, C))
    try:
        # Constant-index weight/bias blocks only need a single VMEM buffer.
        out = build(pl.Buffered(1))(*args)
    except Exception:
        # Fallback if this JAX build rejects buffer_count=1 pipeline mode.
        out = build(None)(*args)

    return out.reshape(B, T, C)


def mlp_reference(x, w_fc, b_fc, w_proj, b_proj):
    h = jnp.einsum("btc,ch->bth", x, w_fc) + b_fc
    h = jax.nn.gelu(h, approximate=True)
    y = jnp.einsum("bth,hc->btc", h, w_proj) + b_proj
    return y


if __name__ == "__main__":
    # ---- Small config consistent with the module: n_embd=32, batch=2, T=8 ----
    B, T, C = 2, 8, 32
    H = 4 * C

    key = jax.random.PRNGKey(0)
    k_x, k_wfc, k_bfc, k_wp, k_bp, k_x2 = jax.random.split(key, 6)

    x = jax.random.normal(k_x, (B, T, C), dtype=jnp.float32)
    lim_fc = 1.0 / (C ** 0.5)
    lim_pj = 1.0 / (H ** 0.5)
    w_fc = jax.random.uniform(k_wfc, (C, H), jnp.float32, -lim_fc, lim_fc)
    b_fc = jax.random.uniform(k_bfc, (H,), jnp.float32, -lim_fc, lim_fc)
    w_proj = jax.random.uniform(k_wp, (H, C), jnp.float32, -lim_pj, lim_pj)
    b_proj = jax.random.uniform(k_bp, (C,), jnp.float32, -lim_pj, lim_pj)

    out = mlp_pallas(x, w_fc, b_fc, w_proj, b_proj)
    out = jax.block_until_ready(out)

    ref = mlp_reference(x, w_fc, b_fc, w_proj, b_proj)
    assert out.shape == (B, T, C)
    assert jnp.allclose(out, ref, atol=1e-5, rtol=1e-5)

    # ---- bf16 path exercising multi-tile M (incl. a ragged last tile) and
    # ---- multi-chunk H: C=256 -> H=1024 (TH=512, 2 chunks), M=600 (TM=256).
    B2, T2, C2 = 2, 300, 256
    H2 = 4 * C2
    lim_fc2 = 1.0 / (C2 ** 0.5)
    lim_pj2 = 1.0 / (H2 ** 0.5)
    x2f = jax.random.normal(k_x2, (B2, T2, C2), dtype=jnp.float32)
    w_fc2 = jax.random.uniform(k_wfc, (C2, H2), jnp.float32, -lim_fc2, lim_fc2)
    b_fc2 = jax.random.uniform(k_bfc, (H2,), jnp.float32, -lim_fc2, lim_fc2)
    w_pj2 = jax.random.uniform(k_wp, (H2, C2), jnp.float32, -lim_pj2, lim_pj2)
    b_pj2 = jax.random.uniform(k_bp, (C2,), jnp.float32, -lim_pj2, lim_pj2)

    out_b = mlp_pallas(x2f.astype(jnp.bfloat16),
                       w_fc2.astype(jnp.bfloat16), b_fc2.astype(jnp.bfloat16),
                       w_pj2.astype(jnp.bfloat16), b_pj2.astype(jnp.bfloat16),
                       tm=256, th=512)
    out_b = jax.block_until_ready(out_b)
    ref_b = mlp_reference(x2f, w_fc2, b_fc2, w_pj2, b_pj2)
    assert out_b.shape == (B2, T2, C2)
    assert jnp.allclose(out_b.astype(jnp.float32), ref_b, atol=5e-2, rtol=5e-2)

    print("KERNEL_OK")
</pallas_src>

<mosaic_0001>
module attributes {stable_mosaic.version = 11 : i64} {
  func.func @mlp_kernel(%arg0: i32, %arg1: memref<16x32xf32, #tpu.memory_space<vmem>>, %arg2: memref<32x128xf32, #tpu.memory_space<vmem>>, %arg3: memref<1x128xf32, #tpu.memory_space<vmem>>, %arg4: memref<128x32xf32, #tpu.memory_space<vmem>>, %arg5: memref<1x32xf32, #tpu.memory_space<vmem>>, %arg6: memref<16x32xf32, #tpu.memory_space<vmem>>) attributes {dimension_semantics = [#tpu.dimension_semantics<parallel>], iteration_bounds = array<i64: 1>, scalar_prefetch = 0 : i64, scratch_operands = 0 : i64, tpu.core_type = #tpu.core_type<tc>, window_params = [{transform_indices = @transform_0, window_bounds = array<i64: 16, 32>}, {pipeline_mode = #tpu.pipeline_mode<synchronous>, transform_indices = @transform_1, window_bounds = array<i64: 32, 128>}, {pipeline_mode = #tpu.pipeline_mode<synchronous>, transform_indices = @transform_2, window_bounds = array<i64: 1, 128>}, {pipeline_mode = #tpu.pipeline_mode<synchronous>, transform_indices = @transform_3, window_bounds = array<i64: 128, 32>}, {pipeline_mode = #tpu.pipeline_mode<synchronous>, transform_indices = @transform_4, window_bounds = array<i64: 1, 32>}, {transform_indices = @transform_5, window_bounds = array<i64: 16, 32>}]} {
    %c0 = arith.constant 0 : index
    %c0_0 = arith.constant 0 : index
    %0 = vector.load %arg1[%c0, %c0_0] : memref<16x32xf32, #tpu.memory_space<vmem>>, vector<16x32xf32>
    %cst = arith.constant 0.000000e+00 : f32
    %1 = vector.broadcast %cst : f32 to vector<16x32xf32>
    %c0_1 = arith.constant 0 : index
    %c0_2 = arith.constant 0 : index
    %2 = vector.load %arg2[%c0_1, %c0_2] : memref<32x128xf32, #tpu.memory_space<vmem>>, vector<32x128xf32>
    %cst_3 = arith.constant dense<0.000000e+00> : vector<16x128xf32>
    %3 = tpu.matmul %0, %2, %cst_3 {dimension_numbers = #tpu.dot_dimension_numbers<[1], [0], [0], [1], [0, 0, 1, 1], [], []>} : vector<16x32xf32>, vector<32x128xf32>, vector<16x128xf32> -> vector<16x128xf32>
    %c0_4 = arith.constant 0 : index
    %c0_5 = arith.constant 0 : index
    %4 = vector.load %arg3[%c0_4, %c0_5] : memref<1x128xf32, #tpu.memory_space<vmem>>, vector<1x128xf32>
    %5 = vector.broadcast %4 : vector<1x128xf32> to vector<16x128xf32>
    %6 = arith.addf %3, %5 : vector<16x128xf32>
    %7 = arith.mulf %6, %6 : vector<16x128xf32>
    %8 = arith.mulf %7, %6 : vector<16x128xf32>
    %cst_6 = arith.constant 4.471500e-02 : f32
    %9 = vector.broadcast %cst_6 : f32 to vector<16x128xf32>
    %10 = arith.mulf %9, %8 : vector<16x128xf32>
    %11 = arith.addf %6, %10 : vector<16x128xf32>
    %cst_7 = arith.constant 0.797884583 : f32
    %12 = vector.broadcast %cst_7 : f32 to vector<16x128xf32>
    %13 = arith.mulf %12, %11 : vector<16x128xf32>
    %cst_8 = arith.constant 5.000000e-01 : f32
    %14 = vector.broadcast %cst_8 : f32 to vector<16x128xf32>
    %15 = arith.mulf %14, %6 : vector<16x128xf32>
    %16 = math.tanh %13 : vector<16x128xf32>
    %cst_9 = arith.constant 1.000000e+00 : f32
    %17 = vector.broadcast %cst_9 : f32 to vector<16x128xf32>
    %18 = arith.addf %17, %16 : vector<16x128xf32>
    %19 = arith.mulf %15, %18 : vector<16x128xf32>
    %c0_10 = arith.constant 0 : index
    %c0_11 = arith.constant 0 : index
    %20 = vector.load %arg4[%c0_10, %c0_11] : memref<128x32xf32, #tpu.memory_space<vmem>>, vector<128x32xf32>
    %cst_12 = arith.constant dense<0.000000e+00> : vector<16x32xf32>
    %21 = tpu.matmul %19, %20, %cst_12 {dimension_numbers = #tpu.dot_dimension_numbers<[1], [0], [0], [1], [0, 0, 1, 1], [], []>} : vector<16x128xf32>, vector<128x32xf32>, vector<16x32xf32> -> vector<16x32xf32>
    %22 = arith.addf %1, %21 : vector<16x32xf32>
    %c0_13 = arith.constant 0 : index
    %c0_14 = arith.constant 0 : index
    %23 = vector.load %arg5[%c0_13, %c0_14] : memref<1x32xf32, #tpu.memory_space<vmem>>, vector<1x32xf32>
    %24 = vector.broadcast %23 : vector<1x32xf32> to vector<16x32xf32>
    %25 = arith.addf %22, %24 : vector<16x32xf32>
    %c0_15 = arith.constant 0 : index
    %c0_16 = arith.constant 0 : index
    %26 = vector.load %arg6[%c0_15, %c0_16] : memref<16x32xf32, #tpu.memory_space<vmem>>, vector<16x32xf32>
    tpu.vector_store %arg6[%c0_15, %c0_16], %25 {strides = array<i32>} : memref<16x32xf32, #tpu.memory_space<vmem>>, vector<16x32xf32>,
    return
  }
  func.func @transform_0(%arg0: i32) -> (i32, i32) {
    %c0_i32 = arith.constant 0 : i32
    %c0_i32_0 = arith.constant 0 : i32
    return %arg0, %c0_i32 : i32, i32
  }
  func.func @transform_1(%arg0: i32) -> (i32, i32) {
    %c0_i32 = arith.constant 0 : i32
    %c0_i32_0 = arith.constant 0 : i32
    %c0_i32_1 = arith.constant 0 : i32
    return %c0_i32, %c0_i32_0 : i32, i32
  }
  func.func @transform_2(%arg0: i32) -> (i32, i32) {
    %c0_i32 = arith.constant 0 : i32
    %c0_i32_0 = arith.constant 0 : i32
    %c0_i32_1 = arith.constant 0 : i32
    return %c0_i32, %c0_i32_0 : i32, i32
  }
  func.func @transform_3(%arg0: i32) -> (i32, i32) {
    %c0_i32 = arith.constant 0 : i32
    %c0_i32_0 = arith.constant 0 : i32
    %c0_i32_1 = arith.constant 0 : i32
    return %c0_i32, %c0_i32_0 : i32, i32
  }
  func.func @transform_4(%arg0: i32) -> (i32, i32) {
    %c0_i32 = arith.constant 0 : i32
    %c0_i32_0 = arith.constant 0 : i32
    %c0_i32_1 = arith.constant 0 : i32
    return %c0_i32, %c0_i32_0 : i32, i32
  }
  func.func @transform_5(%arg0: i32) -> (i32, i32) {
    %c0_i32 = arith.constant 0 : i32
    %c0_i32_0 = arith.constant 0 : i32
    return %arg0, %c0_i32 : i32, i32
  }
}

module attributes {stable_mosaic.version = 11 : i64} {
  func.func @mlp_kernel(%arg0: i32, %arg1: memref<16x32xf32, #tpu.memory_space<vmem>>, %arg2: memref<32x128xf32, #tpu.memory_space<vmem>>, %arg3: memref<1x128xf32, #tpu.memory_space<vmem>>, %arg4: memref<128x32xf32, #tpu.memory_space<vmem>>, %arg5: memref<1x32xf32, #tpu.memory_space<vmem>>, %arg6: memref<16x32xf32, #tpu.memory_space<vmem>>) attributes {dimension_semantics = [#tpu.dimension_semantics<parallel>], iteration_bounds = array<i64: 1>, scalar_prefetch = 0 : i64, scratch_operands = 0 : i64, tpu.core_type = #tpu.core_type<tc>, window_params = [{transform_indices = @transform_0, window_bounds = array<i64: 16, 32>}, {pipeline_mode = #tpu.pipeline_mode<synchronous>, transform_indices = @transform_1, window_bounds = array<i64: 32, 128>}, {pipeline_mode = #tpu.pipeline_mode<synchronous>, transform_indices = @transform_2, window_bounds = array<i64: 1, 128>}, {pipeline_mode = #tpu.pipeline_mode<synchronous>, transform_indices = @transform_3, window_bounds = array<i64: 128, 32>}, {pipeline_mode = #tpu.pipeline_mode<synchronous>, transform_indices = @transform_4, window_bounds = array<i64: 1, 32>}, {transform_indices = @transform_5, window_bounds = array<i64: 16, 32>}]} {
    %c0 = arith.constant 0 : index
    %c0_0 = arith.constant 0 : index
    %0 = vector.load %arg1[%c0, %c0_0] : memref<16x32xf32, #tpu.memory_space<vmem>>, vector<16x32xf32>
    %cst = arith.constant 0.000000e+00 : f32
    %1 = vector.broadcast %cst : f32 to vector<16x32xf32>
    %c0_1 = arith.constant 0 : index
    %c0_2 = arith.constant 0 : index
    %2 = vector.load %arg2[%c0_1, %c0_2] : memref<32x128xf32, #tpu.memory_space<vmem>>, vector<32x128xf32>
    %cst_3 = arith.constant dense<0.000000e+00> : vector<16x128xf32>
    %3 = tpu.matmul %0, %2, %cst_3 {dimension_numbers = #tpu.dot_dimension_numbers<[1], [0], [0], [1], [0, 0, 1, 1], [], []>} : vector<16x32xf32>, vector<32x128xf32>, vector<16x128xf32> -> vector<16x128xf32>
    %c0_4 = arith.constant 0 : index
    %c0_5 = arith.constant 0 : index
    %4 = vector.load %arg3[%c0_4, %c0_5] : memref<1x128xf32, #tpu.memory_space<vmem>>, vector<1x128xf32>
    %5 = vector.broadcast %4 : vector<1x128xf32> to vector<16x128xf32>
    %6 = arith.addf %3, %5 : vector<16x128xf32>
    %7 = arith.mulf %6, %6 : vector<16x128xf32>
    %8 = arith.mulf %7, %6 : vector<16x128xf32>
    %cst_6 = arith.constant 4.471500e-02 : f32
    %9 = vector.broadcast %cst_6 : f32 to vector<16x128xf32>
    %10 = arith.mulf %9, %8 : vector<16x128xf32>
    %11 = arith.addf %6, %10 : vector<16x128xf32>
    %cst_7 = arith.constant 0.797884583 : f32
    %12 = vector.broadcast %cst_7 : f32 to vector<16x128xf32>
    %13 = arith.mulf %12, %11 : vector<16x128xf32>
    %cst_8 = arith.constant 5.000000e-01 : f32
    %14 = vector.broadcast %cst_8 : f32 to vector<16x128xf32>
    %15 = arith.mulf %14, %6 : vector<16x128xf32>
    %16 = math.tanh %13 : vector<16x128xf32>
    %cst_9 = arith.constant 1.000000e+00 : f32
    %17 = vector.broadcast %cst_9 : f32 to vector<16x128xf32>
    %18 = arith.addf %17, %16 : vector<16x128xf32>
    %19 = arith.mulf %15, %18 : vector<16x128xf32>
    %c0_10 = arith.constant 0 : index
    %c0_11 = arith.constant 0 : index
    %20 = vector.load %arg4[%c0_10, %c0_11] : memref<128x32xf32, #tpu.memory_space<vmem>>, vector<128x32xf32>
    %cst_12 = arith.constant dense<0.000000e+00> : vector<16x32xf32>
    %21 = tpu.matmul %19, %20, %cst_12 {dimension_numbers = #tpu.dot_dimension_numbers<[1], [0], [0], [1], [0, 0, 1, 1], [], []>} : vector<16x128xf32>, vector<128x32xf32>, vector<16x32xf32> -> vector<16x32xf32>
    %22 = arith.addf %1, %21 : vector<16x32xf32>
    %c0_13 = arith.constant 0 : index
    %c0_14 = arith.constant 0 : index
    %23 = vector.load %arg5[%c0_13, %c0_14] : memref<1x32xf32, #tpu.memory_space<vmem>>, vector<1x32xf32>
    %24 = vector.broadcast %23 : vector<1x32xf32> to vector<16x32xf32>
    %25 = arith.addf %22, %24 : vector<16x32xf32>
    %c0_15 = arith.constant 0 : index
    %c0_16 = arith.constant 0 : index
    %26 = vector.load %arg6[%c0_15, %c0_16] : memref<16x32xf32, #tpu.memory_space<vmem>>, vector<16x32xf32>
    tpu.vector_store %arg6[%c0_15, %c0_16], %25 {strides = array<i32>} : memref<16x32xf32, #tpu.memory_space<vmem>>, vector<16x32xf32>,
    return
  }
  func.func @transform_0(%arg0: i32) -> (i32, i32) {
    %c0_i32 = arith.constant 0 : i32
    %c0_i32_0 = arith.constant 0 : i32
    return %arg0, %c0_i32 : i32, i32
  }
  func.func @transform_1(%arg0: i32) -> (i32, i32) {
    %c0_i32 = arith.constant 0 : i32
    %c0_i32_0 = arith.constant 0 : i32
    %c0_i32_1 = arith.constant 0 : i32
    return %c0_i32, %c0_i32_0 : i32, i32
  }
  func.func @transform_2(%arg0: i32) -> (i32, i32) {
    %c0_i32 = arith.constant 0 : i32
    %c0_i32_0 = arith.constant 0 : i32
    %c0_i32_1 = arith.constant 0 : i32
    return %c0_i32, %c0_i32_0 : i32, i32
  }
  func.func @transform_3(%arg0: i32) -> (i32, i32) {
    %c0_i32 = arith.constant 0 : i32
    %c0_i32_0 = arith.constant 0 : i32
    %c0_i32_1 = arith.constant 0 : i32
    return %c0_i32, %c0_i32_0 : i32, i32
  }
  func.func @transform_4(%arg0: i32) -> (i32, i32) {
    %c0_i32 = arith.constant 0 : i32
    %c0_i32_0 = arith.constant 0 : i32
    %c0_i32_1 = arith.constant 0 : i32
    return %c0_i32, %c0_i32_0 : i32, i32
  }
  func.func @transform_5(%arg0: i32) -> (i32, i32) {
    %c0_i32 = arith.constant 0 : i32
    %c0_i32_0 = arith.constant 0 : i32
    return %arg0, %c0_i32 : i32, i32
  }
}

</mosaic_0001>

<llo_original>
// kernel: tpu_custom_call.1
$region0: #{tpu_custom_call.1}
  #allocation0 [shape = 'u32[]', space=smem, size = 0x4, offset = 0x4, fixed_abs, tag = 'smem constant byte address 0x4 - core index']
  #allocation1 [shape = 'u32[144,128]{1,0:T(1,128)}', space=vmem, size = 0x12000, scoped, tag = 'internal scratch']
  %s0 = inlined_call_operand.hbm [shape: f32[16,32], index: 0, kind: input, shape index: {}]
  %s1 = inlined_call_operand.hbm [shape: f32[32,128], index: 1, kind: input, shape index: {}]
  %s2 = inlined_call_operand.hbm [shape: f32[1,128], index: 2, kind: input, shape index: {}]
  %s3 = inlined_call_operand.hbm [shape: f32[128,32], index: 3, kind: input, shape index: {}]
  %s4 = inlined_call_operand.hbm [shape: f32[1,32], index: 4, kind: input, shape index: {}]
  %s5 = inlined_call_operand.hbm [shape: f32[16,32], index: 5, kind: output, shape index: {}]
  %s6 = sld [smem:[#allocation0]]
  $region50: #{tpu_custom_call.1} parent=0
    _
  %s8 = ssub.s32 1, %s6
  %s9 = scalar_select 0, %s8, %s6
  $region1: #{tpu_custom_call.1} parent=0
    #allocation2 [shape = 'u8[8192]{0}', space=vmem, size = 0x2000, scoped, tag = 'input window, operand 0, single buffered']
    #allocation3 [shape = 's32[1]{0}', space=sflag, size = 0x4, scoped, tag = 'scoped memory for tpu_custom_call.1']
    #allocation4 [shape = 's32[1]{0}', space=sflag, size = 0x4, scoped, tag = 'scoped memory for tpu_custom_call.1']
    #allocation5 [shape = 'u8[16384]{0}', space=vmem, size = 0x4000, scoped, tag = 'input window, operand 1, single buffered']
    #allocation6 [shape = 's32[1]{0}', space=sflag, size = 0x4, scoped, tag = 'scoped memory for tpu_custom_call.1']
    #allocation7 [shape = 'u8[512]{0}', space=vmem, size = 0x400, scoped, tag = 'input window, operand 2, single buffered']
    #allocation8 [shape = 'u8[65536]{0}', space=vmem, size = 0x10000, scoped, tag = 'input window, operand 3, single buffered']
    #allocation9 [shape = 's32[1]{0}', space=sflag, size = 0x4, scoped, tag = 'scoped memory for tpu_custom_call.1']
    #allocation10 [shape = 'u8[512]{0}', space=vmem, size = 0x400, scoped, tag = 'input window, operand 4, single buffered']
    #allocation11 [shape = 'u8[8192]{0}', space=vmem, size = 0x2000, scoped, tag = 'output window, operand 0, single buffered']
    %10 = vsyncpa [#allocation3], 0
    %11 = vsyncpa [#allocation6], 0
    %12 = vsyncpa [#allocation9], 0
    %13 = vsyncpa [#allocation4], 0
    // Predicated region
    $region2: #{tpu_custom_call.1} parent=1 // pred_check
      _
    $region3: #{tpu_custom_call.1} parent=1 // pred_check_branch
      %15 = sbr.rel (0) target = $region5
    $region4: #{tpu_custom_call.1} parent=1 // pred_region
      %s17 = ssub.s32 256, 256
      %18 = vsyncadd [#allocation3], %s17
      %s19 = sshll.u32 [#allocation2], 4
      %s20 = int_to_ptr.vmem [resolvable:$true] %s19
      %25 = dma.hbm_to_vmem [thread:$0]  %s0, 256, %s20, [#allocation3], 128, 128, 8
    $region5: #{tpu_custom_call.1} parent=1 // pred_fallthru
      _
    // Predicated region
    $region6: #{tpu_custom_call.1} parent=1 // pred_check
      _
    $region7: #{tpu_custom_call.1} parent=1 // pred_check_branch
      %27 = sbr.rel (0) target = $region9
    $region8: #{tpu_custom_call.1} parent=1 // pred_region
      %s29 = ssub.s32 512, 512
      %30 = vsyncadd [#allocation6], %s29
      %s31 = sshll.u32 [#allocation5], 4
      %s32 = int_to_ptr.vmem [resolvable:$true] %s31
      %37 = dma.hbm_to_vmem [thread:$0]  %s1, 512, %s32, [#allocation6], 128, 128, 8
    $region9: #{tpu_custom_call.1} parent=1 // pred_fallthru
      _
    // Predicated region
    $region10: #{tpu_custom_call.1} parent=1 // pred_check
      _
    $region11: #{tpu_custom_call.1} parent=1 // pred_check_branch
      %39 = sbr.rel (0) target = $region13
    $region12: #{tpu_custom_call.1} parent=1 // pred_region
      %s41 = ssub.s32 16, 16
      %42 = vsyncadd [#allocation6], %s41
      %s44 = sshll.u32 [#allocation7], 4
      %s45 = int_to_ptr.vmem [resolvable:$true] %s44
      %47 = dma.hbm_to_vmem [thread:$0]  %s2, 16, %s45, [#allocation6]
    $region13: #{tpu_custom_call.1} parent=1 // pred_fallthru
      _
    // Predicated region
    $region14: #{tpu_custom_call.1} parent=1 // pred_check
      _
    $region15: #{tpu_custom_call.1} parent=1 // pred_check_branch
      %49 = sbr.rel (0) target = $region17
    $region16: #{tpu_custom_call.1} parent=1 // pred_region
      %s51 = ssub.s32 2048, 2048
      %52 = vsyncadd [#allocation9], %s51
      %s53 = sshll.u32 [#allocation8], 4
      %s54 = int_to_ptr.vmem [resolvable:$true] %s53
      %59 = dma.hbm_to_vmem [thread:$0]  %s3, 2048, %s54, [#allocation9], 128, 128, 8
    $region17: #{tpu_custom_call.1} parent=1 // pred_fallthru
      _
    // Predicated region
    $region18: #{tpu_custom_call.1} parent=1 // pred_check
      _
    $region19: #{tpu_custom_call.1} parent=1 // pred_check_branch
      %61 = sbr.rel (0) target = $region21
    $region20: #{tpu_custom_call.1} parent=1 // pred_region
      %s63 = ssub.s32 16, 16
      %64 = vsyncadd [#allocation9], %s63
      %s66 = sshll.u32 [#allocation10], 4
      %s67 = int_to_ptr.vmem [resolvable:$true] %s66
      %69 = dma.hbm_to_vmem [thread:$0]  %s4, 16, %s67, [#allocation9]
    $region21: #{tpu_custom_call.1} parent=1 // pred_fallthru
      _
    // Predicated region
    $region22: #{tpu_custom_call.1} parent=1 // pred_check
      _
    $region23: #{tpu_custom_call.1} parent=1 // pred_check_branch
      %71 = sbr.rel (0) target = $region25
    $region24: #{tpu_custom_call.1} parent=1 // pred_region
      %72 = dma.done [#allocation3], 256
    $region25: #{tpu_custom_call.1} parent=1 // pred_fallthru
      _
    // Predicated region
    $region26: #{tpu_custom_call.1} parent=1 // pred_check
      _
    $region27: #{tpu_custom_call.1} parent=1 // pred_check_branch
      %74 = sbr.rel (0) target = $region29
    $region28: #{tpu_custom_call.1} parent=1 // pred_region
      %75 = dma.done [#allocation6], 512
    $region29: #{tpu_custom_call.1} parent=1 // pred_fallthru
      _
    // Predicated region
    $region30: #{tpu_custom_call.1} parent=1 // pred_check
      _
    $region31: #{tpu_custom_call.1} parent=1 // pred_check_branch
      %77 = sbr.rel (0) target = $region33
    $region32: #{tpu_custom_call.1} parent=1 // pred_region
      %78 = dma.done [#allocation6], 16
    $region33: #{tpu_custom_call.1} parent=1 // pred_fallthru
      _
    // Predicated region
    $region34: #{tpu_custom_call.1} parent=1 // pred_check
      _
    $region35: #{tpu_custom_call.1} parent=1 // pred_check_branch
      %80 = sbr.rel (0) target = $region37
    $region36: #{tpu_custom_call.1} parent=1 // pred_region
      %81 = dma.done [#allocation9], 2048
    $region37: #{tpu_custom_call.1} parent=1 // pred_fallthru
      _
    // Predicated region
    $region38: #{tpu_custom_call.1} parent=1 // pred_check
      _
    $region39: #{tpu_custom_call.1} parent=1 // pred_check_branch
      %83 = sbr.rel (0) target = $region41
    $region40: #{tpu_custom_call.1} parent=1 // pred_region
      %84 = dma.done [#allocation9], 16
    $region41: #{tpu_custom_call.1} parent=1 // pred_fallthru
      _
    %v85 = vld [vmem:[#allocation2] sm:$0xff]
    %v86 = vld [vmem:[#allocation2 + $0x8] sm:$0xff]
    %v87 = vld [vmem:[#allocation5] sm:$0xff]
    %v88 = vld [vmem:[#allocation5 + $0x8] sm:$0xff]
    %v89 = vld [vmem:[#allocation5 + $0x10] sm:$0xff]
    %v90 = vld [vmem:[#allocation5 + $0x18] sm:$0xff]
    %v91 = vld [vmem:[#allocation7] sm:$0x1]
    %v93 = vlaneseq
    %v94 = vshrl.u32 %v93, 7
    %v95 = vsub.s32 0, %v94
    %v96 = vrot.slane %v91, %v95
    %vm98 = vcmask 261120
    %v100 = vsel %vm98, %v85, 0
    %v103 = vsel %vm98, %v86, 0
    %105 = vmatprep.subr.mxu0 0.0
    %106 = vmatpush1.msra.mxu0 %v87
    %107 = vmatprep.subr.mxu0 0.0
    %108 = vmatpush1.msra.mxu0 %v88
    %109 = vmatprep.subr.mxu0 0.0
    %110 = vmatpush1.msra.mxu0 %v89
    %111 = vmatprep.subr.mxu0 0.0
    %112 = vmatpush1.msra.mxu0 %v90
    %113 = vmatprep.subr.mxu0 0.0
    %114 = vmatpush1.msra.mxu0 0.0
    %115 = vmatprep.subr.mxu0 0.0
    %116 = vmatpush1.msra.mxu0 0.0
    %117 = vmatprep.subr.mxu0 0.0
    %118 = vmatpush1.msra.mxu0 0.0
    %119 = vmatprep.subr.mxu0 0.0
    %120 = vmatpush1.msra.mxu0 0.0
    %121 = vmatprep.subr.mxu0 0.0
    %122 = vmatpush1.msra.mxu0 0.0
    %123 = vmatprep.subr.mxu0 0.0
    %124 = vmatpush1.msra.mxu0 0.0
    %125 = vmatprep.subr.mxu0 0.0
    %126 = vmatpush1.msra.mxu0 0.0
    %127 = vmatprep.subr.mxu0 0.0
    %128 = vmatpush1.msra.mxu0 0.0
    %129 = vmatprep.subr.mxu0 0.0
    %130 = vmatpush1.msra.mxu0 0.0
    %131 = vmatprep.subr.mxu0 0.0
    %132 = vmatpush1.msra.mxu0 0.0
    %133 = vmatprep.subr.mxu0 0.0
    %134 = vmatpush1.msra.mxu0 0.0
    %135 = vmatprep.subr.mxu0 0.0
    %136 = vmatpush1.msra.mxu0 0.0
    %137 = vmatprep.subr.mxu0 0.0
    %138 = vmatpush1.msra.mxu0 0.0
    %139 = vmatprep.subr.mxu0 0.0
    %140 = vmatpush1.msra.mxu0 0.0
    %141 = vmatprep.subr.mxu0 0.0
    %142 = vmatpush1.msra.mxu0 0.0
    %143 = vmatprep.subr.mxu0 0.0
    %144 = vmatpush1.msra.mxu0 0.0
    %145 = vmatprep.subr.mxu0 0.0
    %146 = vmatpush1.msra.mxu0 0.0
    %147 = vmatprep.subr.mxu0 0.0
    %148 = vmatpush1.msra.mxu0 0.0
    %149 = vmatprep.subr.mxu0 0.0
    %150 = vmatpush1.msra.mxu0 0.0
    %151 = vmatprep.subr.mxu0 0.0
    %152 = vmatpush1.msra.mxu0 0.0
    %153 = vmatprep.subr.mxu0 0.0
    %154 = vmatpush1.msra.mxu0 0.0
    %155 = vmatprep.subr.mxu0 0.0
    %156 = vmatpush1.msra.mxu0 0.0
    %157 = vmatprep.subr.mxu0 0.0
    %158 = vmatpush1.msra.mxu0 0.0
    %159 = vmatprep.subr.mxu0 0.0
    %160 = vmatpush1.msra.mxu0 0.0
    %161 = vmatprep.subr.mxu0 0.0
    %162 = vmatpush1.msra.mxu0 0.0
    %163 = vmatprep.subr.mxu0 0.0
    %164 = vmatpush1.msra.mxu0 0.0
    %165 = vmatprep.subr.mxu0 0.0
    %166 = vmatpush1.msra.mxu0 0.0
    %167 = vmatprep.subr.mxu0 0.0
    %168 = vmatpush1.msra.mxu0 0.0
    %169 = vmatprep.mubr.f32.mxu0 0.0
    %170 = vmatmul.mubr.f32.gmra.mrb[0].mxu0 %v100
    %v171 = vpop.f32.mrb[0].mxu0
    %v172 = vadd.f32 %v96, %v171
    %v173 = vpop.f32.mrb[0].mxu0
    %174 = vmatprep.mubr.f32.mxu0 0.0
    %175 = vmatmul.mubr.f32.gmra.mrb[0].mxu0 %v103
    %v176 = vpop.f32.mrb[0].mxu0
    %v177 = vadd.f32 %v96, %v176
    %v178 = vpop.f32.mrb[0].mxu0
    %179 = vdwg.mxu0
    %v180 = vmul.f32 %v172, %v172
    %v181 = vmul.f32 %v177, %v177
    %v182 = vmul.f32 %v180, %v172
    %v183 = vmul.f32 %v181, %v177
    %v184 = vmul.f32 %v182, 0.044715
    %v185 = vmul.f32 %v183, 0.044715
    %v186 = vadd.f32 %v172, %v184
    %v187 = vadd.f32 %v177, %v185
    %v188 = vmul.f32 %v186, 0.7978846
    %v189 = vmul.f32 %v187, 0.7978846
    %v190 = vmul.f32 %v172, 0.5
    %v191 = vmul.f32 %v177, 0.5
    %v192 = vtanh.pop %v188
    %v193 = vtanh.pop %v189
    %v194 = vadd.f32 %v192, 1.0
    %v195 = vadd.f32 %v193, 1.0
    %v196 = vmul.f32 %v190, %v194
    %v197 = vmul.f32 %v191, %v195
    %v198 = vld [vmem:[#allocation8] sm:$0xff]
    %v199 = vld [vmem:[#allocation8 + $0x8] sm:$0xff]
    %v200 = vld [vmem:[#allocation8 + $0x10] sm:$0xff]
    %v201 = vld [vmem:[#allocation8 + $0x18] sm:$0xff]
    %v202 = vld [vmem:[#allocation8 + $0x20] sm:$0xff]
    %v203 = vld [vmem:[#allocation8 + $0x28] sm:$0xff]
    %v204 = vld [vmem:[#allocation8 + $0x30] sm:$0xff]
    %v205 = vld [vmem:[#allocation8 + $0x38] sm:$0xff]
    %v206 = vld [vmem:[#allocation8 + $0x40] sm:$0xff]
    %v207 = vld [vmem:[#allocation8 + $0x48] sm:$0xff]
    %v208 = vld [vmem:[#allocation8 + $0x50] sm:$0xff]
    %v209 = vld [vmem:[#allocation8 + $0x58] sm:$0xff]
    %v210 = vld [vmem:[#allocation8 + $0x60] sm:$0xff]
    %v211 = vld [vmem:[#allocation8 + $0x68] sm:$0xff]
    %v212 = vld [vmem:[#allocation8 + $0x70] sm:$0xff]
    %v213 = vld [vmem:[#allocation8 + $0x78] sm:$0xff]
    %v214 = vld [vmem:[#allocation10] sm:$0x1]
    %v216 = vlaneseq
    %v217 = vshrl.u32 %v216, 7
    %v218 = vsub.s32 0, %v217
    %v219 = vrot.slane %v214, %v218
    %221 = vmatprep.subr.mxu0 0.0
    %222 = vmatpush1.msra.mxu0 %v198
    %223 = vmatprep.subr.mxu0 0.0
    %224 = vmatpush1.msra.mxu0 %v199
    %225 = vmatprep.subr.mxu0 0.0
    %226 = vmatpush1.msra.mxu0 %v200
    %227 = vmatprep.subr.mxu0 0.0
    %228 = vmatpush1.msra.mxu0 %v201
    %229 = vmatprep.subr.mxu0 0.0
    %230 = vmatpush1.msra.mxu0 %v202
    %231 = vmatprep.subr.mxu0 0.0
    %232 = vmatpush1.msra.mxu0 %v203
    %233 = vmatprep.subr.mxu0 0.0
    %234 = vmatpush1.msra.mxu0 %v204
    %235 = vmatprep.subr.mxu0 0.0
    %236 = vmatpush1.msra.mxu0 %v205
    %237 = vmatprep.subr.mxu0 0.0
    %238 = vmatpush1.msra.mxu0 %v206
    %239 = vmatprep.subr.mxu0 0.0
    %240 = vmatpush1.msra.mxu0 %v207
    %241 = vmatprep.subr.mxu0 0.0
    %242 = vmatpush1.msra.mxu0 %v208
    %243 = vmatprep.subr.mxu0 0.0
    %244 = vmatpush1.msra.mxu0 %v209
    %245 = vmatprep.subr.mxu0 0.0
    %246 = vmatpush1.msra.mxu0 %v210
    %247 = vmatprep.subr.mxu0 0.0
    %248 = vmatpush1.msra.mxu0 %v211
    %249 = vmatprep.subr.mxu0 0.0
    %250 = vmatpush1.msra.mxu0 %v212
    %251 = vmatprep.subr.mxu0 0.0
    %252 = vmatpush1.msra.mxu0 %v213
    %253 = vmatprep.subr.mxu0 0.0
    %254 = vmatpush1.msra.mxu0 0.0
    %255 = vmatprep.subr.mxu0 0.0
    %256 = vmatpush1.msra.mxu0 0.0
    %257 = vmatprep.subr.mxu0 0.0
    %258 = vmatpush1.msra.mxu0 0.0
    %259 = vmatprep.subr.mxu0 0.0
    %260 = vmatpush1.msra.mxu0 0.0
    %261 = vmatprep.subr.mxu0 0.0
    %262 = vmatpush1.msra.mxu0 0.0
    %263 = vmatprep.subr.mxu0 0.0
    %264 = vmatpush1.msra.mxu0 0.0
    %265 = vmatprep.subr.mxu0 0.0
    %266 = vmatpush1.msra.mxu0 0.0
    %267 = vmatprep.subr.mxu0 0.0
    %268 = vmatpush1.msra.mxu0 0.0
    %269 = vmatprep.subr.mxu0 0.0
    %270 = vmatpush1.msra.mxu0 0.0
    %271 = vmatprep.subr.mxu0 0.0
    %272 = vmatpush1.msra.mxu0 0.0
    %273 = vmatprep.subr.mxu0 0.0
    %274 = vmatpush1.msra.mxu0 0.0
    %275 = vmatprep.subr.mxu0 0.0
    %276 = vmatpush1.msra.mxu0 0.0
    %277 = vmatprep.subr.mxu0 0.0
    %278 = vmatpush1.msra.mxu0 0.0
    %279 = vmatprep.subr.mxu0 0.0
    %280 = vmatpush1.msra.mxu0 0.0
    %281 = vmatprep.subr.mxu0 0.0
    %282 = vmatpush1.msra.mxu0 0.0
    %283 = vmatprep.subr.mxu0 0.0
    %284 = vmatpush1.msra.mxu0 0.0
    %285 = vmatprep.mubr.f32.mxu0 0.0
    %286 = vmatmul.mubr.f32.gmra.mrb[0].mxu0 %v196
    %v287 = vpop.f32.mrb[0].mxu0
    %v288 = vadd.f32 %v219, %v287
    %v289 = vpop.f32.mrb[0].mxu0
    %290 = vmatprep.mubr.f32.mxu0 0.0
    %291 = vmatmul.mubr.f32.gmra.mrb[0].mxu0 %v197
    %v292 = vpop.f32.mrb[0].mxu0
    %v293 = vadd.f32 %v219, %v292
    %v294 = vpop.f32.mrb[0].mxu0
    %295 = vdwg.mxu0
    %296 = vst.msk [vmem:[#allocation11] sm:$0xff] %vm98, %v288
    %297 = vst.msk [vmem:[#allocation11 + $0x8] sm:$0xff] %vm98, %v293
    // Predicated region
    $region42: #{tpu_custom_call.1} parent=1 // pred_check
      _
    $region43: #{tpu_custom_call.1} parent=1 // pred_check_branch
      %299 = sbr.rel (0) target = $region45
    $region44: #{tpu_custom_call.1} parent=1 // pred_region
      %s301 = ssub.s32 256, 256
      %302 = vsyncadd [#allocation4], %s301
      %s303 = sshll.u32 [#allocation11], 4
      %s304 = int_to_ptr.vmem [resolvable:$true] %s303
      %309 = dma.vmem_to_hbm [thread:$0]  %s304, 256, %s5, [#allocation4], 128, 128, 8
    $region45: #{tpu_custom_call.1} parent=1 // pred_fallthru
      _
    // Predicated region
    $region46: #{tpu_custom_call.1} parent=1 // pred_check
      _
    $region47: #{tpu_custom_call.1} parent=1 // pred_check_branch
      %311 = sbr.rel (0) target = $region49
    $region48: #{tpu_custom_call.1} parent=1 // pred_region
      %312 = dma.done [#allocation4], 256
    $region49: #{tpu_custom_call.1} parent=1 // pred_fallthru
      _
    %313 = vsyncpa [#allocation3], 1
    %314 = vsyncpa [#allocation6], 1
    %315 = vsyncpa [#allocation9], 1
    %316 = vsyncpa [#allocation4], 1

// kernel: tpu_custom_call.1
$region0: #{tpu_custom_call.1}
  #allocation0 [shape = 'u32[]', space=smem, size = 0x4, offset = 0x4, fixed_abs, tag = 'smem constant byte address 0x4 - core index']
  #allocation1 [shape = 'u32[144,128]{1,0:T(1,128)}', space=vmem, size = 0x12000, scoped, tag = 'internal scratch']
  %s0 = inlined_call_operand.hbm [shape: f32[16,32], index: 0, kind: input, shape index: {}]
  %s1 = inlined_call_operand.hbm [shape: f32[32,128], index: 1, kind: input, shape index: {}]
  %s2 = inlined_call_operand.hbm [shape: f32[1,128], index: 2, kind: input, shape index: {}]
  %s3 = inlined_call_operand.hbm [shape: f32[128,32], index: 3, kind: input, shape index: {}]
  %s4 = inlined_call_operand.hbm [shape: f32[1,32], index: 4, kind: input, shape index: {}]
  %s5 = inlined_call_operand.hbm [shape: f32[16,32], index: 5, kind: output, shape index: {}]
  %s6 = sld [smem:[#allocation0]]
  $region50: #{tpu_custom_call.1} parent=0
    _
  %s8 = ssub.s32 1, %s6
  %s9 = scalar_select 0, %s8, %s6
  $region1: #{tpu_custom_call.1} parent=0
    #allocation2 [shape = 'u8[8192]{0}', space=vmem, size = 0x2000, scoped, tag = 'input window, operand 0, single buffered']
    #allocation3 [shape = 's32[1]{0}', space=sflag, size = 0x4, scoped, tag = 'scoped memory for tpu_custom_call.1']
    #allocation4 [shape = 's32[1]{0}', space=sflag, size = 0x4, scoped, tag = 'scoped memory for tpu_custom_call.1']
    #allocation5 [shape = 'u8[16384]{0}', space=vmem, size = 0x4000, scoped, tag = 'input window, operand 1, single buffered']
    #allocation6 [shape = 's32[1]{0}', space=sflag, size = 0x4, scoped, tag = 'scoped memory for tpu_custom_call.1']
    #allocation7 [shape = 'u8[512]{0}', space=vmem, size = 0x400, scoped, tag = 'input window, operand 2, single buffered']
    #allocation8 [shape = 'u8[65536]{0}', space=vmem, size = 0x10000, scoped, tag = 'input window, operand 3, single buffered']
    #allocation9 [shape = 's32[1]{0}', space=sflag, size = 0x4, scoped, tag = 'scoped memory for tpu_custom_call.1']
    #allocation10 [shape = 'u8[512]{0}', space=vmem, size = 0x400, scoped, tag = 'input window, operand 4, single buffered']
    #allocation11 [shape = 'u8[8192]{0}', space=vmem, size = 0x2000, scoped, tag = 'output window, operand 0, single buffered']
    %10 = vsyncpa [#allocation3], 0
    %11 = vsyncpa [#allocation6], 0
    %12 = vsyncpa [#allocation9], 0
    %13 = vsyncpa [#allocation4], 0
    // Predicated region
    $region2: #{tpu_custom_call.1} parent=1 // pred_check
      _
    $region3: #{tpu_custom_call.1} parent=1 // pred_check_branch
      %15 = sbr.rel (0) target = $region5
    $region4: #{tpu_custom_call.1} parent=1 // pred_region
      %s17 = ssub.s32 256, 256
      %18 = vsyncadd [#allocation3], %s17
      %s19 = sshll.u32 [#allocation2], 4
      %s20 = int_to_ptr.vmem [resolvable:$true] %s19
      %25 = dma.hbm_to_vmem [thread:$0]  %s0, 256, %s20, [#allocation3], 128, 128, 8
    $region5: #{tpu_custom_call.1} parent=1 // pred_fallthru
      _
    // Predicated region
    $region6: #{tpu_custom_call.1} parent=1 // pred_check
      _
    $region7: #{tpu_custom_call.1} parent=1 // pred_check_branch
      %27 = sbr.rel (0) target = $region9
    $region8: #{tpu_custom_call.1} parent=1 // pred_region
      %s29 = ssub.s32 512, 512
      %30 = vsyncadd [#allocation6], %s29
      %s31 = sshll.u32 [#allocation5], 4
      %s32 = int_to_ptr.vmem [resolvable:$true] %s31
      %37 = dma.hbm_to_vmem [thread:$0]  %s1, 512, %s32, [#allocation6], 128, 128, 8
    $region9: #{tpu_custom_call.1} parent=1 // pred_fallthru
      _
    // Predicated region
    $region10: #{tpu_custom_call.1} parent=1 // pred_check
      _
    $region11: #{tpu_custom_call.1} parent=1 // pred_check_branch
      %39 = sbr.rel (0) target = $region13
    $region12: #{tpu_custom_call.1} parent=1 // pred_region
      %s41 = ssub.s32 16, 16
      %42 = vsyncadd [#allocation6], %s41
      %s44 = sshll.u32 [#allocation7], 4
      %s45 = int_to_ptr.vmem [resolvable:$true] %s44
      %47 = dma.hbm_to_vmem [thread:$0]  %s2, 16, %s45, [#allocation6]
    $region13: #{tpu_custom_call.1} parent=1 // pred_fallthru
      _
    // Predicated region
    $region14: #{tpu_custom_call.1} parent=1 // pred_check
      _
    $region15: #{tpu_custom_call.1} parent=1 // pred_check_branch
      %49 = sbr.rel (0) target = $region17
    $region16: #{tpu_custom_call.1} parent=1 // pred_region
      %s51 = ssub.s32 2048, 2048
      %52 = vsyncadd [#allocation9], %s51
      %s53 = sshll.u32 [#allocation8], 4
      %s54 = int_to_ptr.vmem [resolvable:$true] %s53
      %59 = dma.hbm_to_vmem [thread:$0]  %s3, 2048, %s54, [#allocation9], 128, 128, 8
    $region17: #{tpu_custom_call.1} parent=1 // pred_fallthru
      _
    // Predicated region
    $region18: #{tpu_custom_call.1} parent=1 // pred_check
      _
    $region19: #{tpu_custom_call.1} parent=1 // pred_check_branch
      %61 = sbr.rel (0) target = $region21
    $region20: #{tpu_custom_call.1} parent=1 // pred_region
      %s63 = ssub.s32 16, 16
      %64 = vsyncadd [#allocation9], %s63
      %s66 = sshll.u32 [#allocation10], 4
      %s67 = int_to_ptr.vmem [resolvable:$true] %s66
      %69 = dma.hbm_to_vmem [thread:$0]  %s4, 16, %s67, [#allocation9]
    $region21: #{tpu_custom_call.1} parent=1 // pred_fallthru
      _
    // Predicated region
    $region22: #{tpu_custom_call.1} parent=1 // pred_check
      _
    $region23: #{tpu_custom_call.1} parent=1 // pred_check_branch
      %71 = sbr.rel (0) target = $region25
    $region24: #{tpu_custom_call.1} parent=1 // pred_region
      %72 = dma.done [#allocation3], 256
    $region25: #{tpu_custom_call.1} parent=1 // pred_fallthru
      _
    // Predicated region
    $region26: #{tpu_custom_call.1} parent=1 // pred_check
      _
    $region27: #{tpu_custom_call.1} parent=1 // pred_check_branch
      %74 = sbr.rel (0) target = $region29
    $region28: #{tpu_custom_call.1} parent=1 // pred_region
      %75 = dma.done [#allocation6], 512
    $region29: #{tpu_custom_call.1} parent=1 // pred_fallthru
      _
    // Predicated region
    $region30: #{tpu_custom_call.1} parent=1 // pred_check
      _
    $region31: #{tpu_custom_call.1} parent=1 // pred_check_branch
      %77 = sbr.rel (0) target = $region33
    $region32: #{tpu_custom_call.1} parent=1 // pred_region
      %78 = dma.done [#allocation6], 16
    $region33: #{tpu_custom_call.1} parent=1 // pred_fallthru
      _
    // Predicated region
    $region34: #{tpu_custom_call.1} parent=1 // pred_check
      _
    $region35: #{tpu_custom_call.1} parent=1 // pred_check_branch
      %80 = sbr.rel (0) target = $region37
    $region36: #{tpu_custom_call.1} parent=1 // pred_region
      %81 = dma.done [#allocation9], 2048
    $region37: #{tpu_custom_call.1} parent=1 // pred_fallthru
      _
    // Predicated region
    $region38: #{tpu_custom_call.1} parent=1 // pred_check
      _
    $region39: #{tpu_custom_call.1} parent=1 // pred_check_branch
      %83 = sbr.rel (0) target = $region41
    $region40: #{tpu_custom_call.1} parent=1 // pred_region
      %84 = dma.done [#allocation9], 16
    $region41: #{tpu_custom_call.1} parent=1 // pred_fallthru
      _
    %v85 = vld [vmem:[#allocation2] sm:$0xff]
    %v86 = vld [vmem:[#allocation2 + $0x8] sm:$0xff]
    %v87 = vld [vmem:[#allocation5] sm:$0xff]
    %v88 = vld [vmem:[#allocation5 + $0x8] sm:$0xff]
    %v89 = vld [vmem:[#allocation5 + $0x10] sm:$0xff]
    %v90 = vld [vmem:[#allocation5 + $0x18] sm:$0xff]
    %v91 = vld [vmem:[#allocation7] sm:$0x1]
    %v93 = vlaneseq
    %v94 = vshrl.u32 %v93, 7
    %v95 = vsub.s32 0, %v94
    %v96 = vrot.slane %v91, %v95
    %vm98 = vcmask 261120
    %v100 = vsel %vm98, %v85, 0
    %v103 = vsel %vm98, %v86, 0
    %105 = vmatprep.subr.mxu0 0.0
    %106 = vmatpush1.msra.mxu0 %v87
    %107 = vmatprep.subr.mxu0 0.0
    %108 = vmatpush1.msra.mxu0 %v88
    %109 = vmatprep.subr.mxu0 0.0
    %110 = vmatpush1.msra.mxu0 %v89
    %111 = vmatprep.subr.mxu0 0.0
    %112 = vmatpush1.msra.mxu0 %v90
    %113 = vmatprep.subr.mxu0 0.0
    %114 = vmatpush1.msra.mxu0 0.0
    %115 = vmatprep.subr.mxu0 0.0
    %116 = vmatpush1.msra.mxu0 0.0
    %117 = vmatprep.subr.mxu0 0.0
    %118 = vmatpush1.msra.mxu0 0.0
    %119 = vmatprep.subr.mxu0 0.0
    %120 = vmatpush1.msra.mxu0 0.0
    %121 = vmatprep.subr.mxu0 0.0
    %122 = vmatpush1.msra.mxu0 0.0
    %123 = vmatprep.subr.mxu0 0.0
    %124 = vmatpush1.msra.mxu0 0.0
    %125 = vmatprep.subr.mxu0 0.0
    %126 = vmatpush1.msra.mxu0 0.0
    %127 = vmatprep.subr.mxu0 0.0
    %128 = vmatpush1.msra.mxu0 0.0
    %129 = vmatprep.subr.mxu0 0.0
    %130 = vmatpush1.msra.mxu0 0.0
    %131 = vmatprep.subr.mxu0 0.0
    %132 = vmatpush1.msra.mxu0 0.0
    %133 = vmatprep.subr.mxu0 0.0
    %134 = vmatpush1.msra.mxu0 0.0
    %135 = vmatprep.subr.mxu0 0.0
    %136 = vmatpush1.msra.mxu0 0.0
    %137 = vmatprep.subr.mxu0 0.0
    %138 = vmatpush1.msra.mxu0 0.0
    %139 = vmatprep.subr.mxu0 0.0
    %140 = vmatpush1.msra.mxu0 0.0
    %141 = vmatprep.subr.mxu0 0.0
    %142 = vmatpush1.msra.mxu0 0.0
    %143 = vmatprep.subr.mxu0 0.0
    %144 = vmatpush1.msra.mxu0 0.0
    %145 = vmatprep.subr.mxu0 0.0
    %146 = vmatpush1.msra.mxu0 0.0
    %147 = vmatprep.subr.mxu0 0.0
    %148 = vmatpush1.msra.mxu0 0.0
    %149 = vmatprep.subr.mxu0 0.0
    %150 = vmatpush1.msra.mxu0 0.0
    %151 = vmatprep.subr.mxu0 0.0
    %152 = vmatpush1.msra.mxu0 0.0
    %153 = vmatprep.subr.mxu0 0.0
    %154 = vmatpush1.msra.mxu0 0.0
    %155 = vmatprep.subr.mxu0 0.0
    %156 = vmatpush1.msra.mxu0 0.0
    %157 = vmatprep.subr.mxu0 0.0
    %158 = vmatpush1.msra.mxu0 0.0
    %159 = vmatprep.subr.mxu0 0.0
    %160 = vmatpush1.msra.mxu0 0.0
    %161 = vmatprep.subr.mxu0 0.0
    %162 = vmatpush1.msra.mxu0 0.0
    %163 = vmatprep.subr.mxu0 0.0
    %164 = vmatpush1.msra.mxu0 0.0
    %165 = vmatprep.subr.mxu0 0.0
    %166 = vmatpush1.msra.mxu0 0.0
    %167 = vmatprep.subr.mxu0 0.0
    %168 = vmatpush1.msra.mxu0 0.0
    %169 = vmatprep.mubr.f32.mxu0 0.0
    %170 = vmatmul.mubr.f32.gmra.mrb[0].mxu0 %v100
    %v171 = vpop.f32.mrb[0].mxu0
    %v172 = vadd.f32 %v96, %v171
    %v173 = vpop.f32.mrb[0].mxu0
    %174 = vmatprep.mubr.f32.mxu0 0.0
    %175 = vmatmul.mubr.f32.gmra.mrb[0].mxu0 %v103
    %v176 = vpop.f32.mrb[0].mxu0
    %v177 = vadd.f32 %v96, %v176
    %v178 = vpop.f32.mrb[0].mxu0
    %179 = vdwg.mxu0
    %v180 = vmul.f32 %v172, %v172
    %v181 = vmul.f32 %v177, %v177
    %v182 = vmul.f32 %v180, %v172
    %v183 = vmul.f32 %v181, %v177
    %v184 = vmul.f32 %v182, 0.044715
    %v185 = vmul.f32 %v183, 0.044715
    %v186 = vadd.f32 %v172, %v184
    %v187 = vadd.f32 %v177, %v185
    %v188 = vmul.f32 %v186, 0.7978846
    %v189 = vmul.f32 %v187, 0.7978846
    %v190 = vmul.f32 %v172, 0.5
    %v191 = vmul.f32 %v177, 0.5
    %v192 = vtanh.pop %v188
    %v193 = vtanh.pop %v189
    %v194 = vadd.f32 %v192, 1.0
    %v195 = vadd.f32 %v193, 1.0
    %v196 = vmul.f32 %v190, %v194
    %v197 = vmul.f32 %v191, %v195
    %v198 = vld [vmem:[#allocation8] sm:$0xff]
    %v199 = vld [vmem:[#allocation8 + $0x8] sm:$0xff]
    %v200 = vld [vmem:[#allocation8 + $0x10] sm:$0xff]
    %v201 = vld [vmem:[#allocation8 + $0x18] sm:$0xff]
    %v202 = vld [vmem:[#allocation8 + $0x20] sm:$0xff]
    %v203 = vld [vmem:[#allocation8 + $0x28] sm:$0xff]
    %v204 = vld [vmem:[#allocation8 + $0x30] sm:$0xff]
    %v205 = vld [vmem:[#allocation8 + $0x38] sm:$0xff]
    %v206 = vld [vmem:[#allocation8 + $0x40] sm:$0xff]
    %v207 = vld [vmem:[#allocation8 + $0x48] sm:$0xff]
    %v208 = vld [vmem:[#allocation8 + $0x50] sm:$0xff]
    %v209 = vld [vmem:[#allocation8 + $0x58] sm:$0xff]
    %v210 = vld [vmem:[#allocation8 + $0x60] sm:$0xff]
    %v211 = vld [vmem:[#allocation8 + $0x68] sm:$0xff]
    %v212 = vld [vmem:[#allocation8 + $0x70] sm:$0xff]
    %v213 = vld [vmem:[#allocation8 + $0x78] sm:$0xff]
    %v214 = vld [vmem:[#allocation10] sm:$0x1]
    %v216 = vlaneseq
    %v217 = vshrl.u32 %v216, 7
    %v218 = vsub.s32 0, %v217
    %v219 = vrot.slane %v214, %v218
    %221 = vmatprep.subr.mxu0 0.0
    %222 = vmatpush1.msra.mxu0 %v198
    %223 = vmatprep.subr.mxu0 0.0
    %224 = vmatpush1.msra.mxu0 %v199
    %225 = vmatprep.subr.mxu0 0.0
    %226 = vmatpush1.msra.mxu0 %v200
    %227 = vmatprep.subr.mxu0 0.0
    %228 = vmatpush1.msra.mxu0 %v201
    %229 = vmatprep.subr.mxu0 0.0
    %230 = vmatpush1.msra.mxu0 %v202
    %231 = vmatprep.subr.mxu0 0.0
    %232 = vmatpush1.msra.mxu0 %v203
    %233 = vmatprep.subr.mxu0 0.0
    %234 = vmatpush1.msra.mxu0 %v204
    %235 = vmatprep.subr.mxu0 0.0
    %236 = vmatpush1.msra.mxu0 %v205
    %237 = vmatprep.subr.mxu0 0.0
    %238 = vmatpush1.msra.mxu0 %v206
    %239 = vmatprep.subr.mxu0 0.0
    %240 = vmatpush1.msra.mxu0 %v207
    %241 = vmatprep.subr.mxu0 0.0
    %242 = vmatpush1.msra.mxu0 %v208
    %243 = vmatprep.subr.mxu0 0.0
    %244 = vmatpush1.msra.mxu0 %v209
    %245 = vmatprep.subr.mxu0 0.0
    %246 = vmatpush1.msra.mxu0 %v210
    %247 = vmatprep.subr.mxu0 0.0
    %248 = vmatpush1.msra.mxu0 %v211
    %249 = vmatprep.subr.mxu0 0.0
    %250 = vmatpush1.msra.mxu0 %v212
    %251 = vmatprep.subr.mxu0 0.0
    %252 = vmatpush1.msra.mxu0 %v213
    %253 = vmatprep.subr.mxu0 0.0
    %254 = vmatpush1.msra.mxu0 0.0
    %255 = vmatprep.subr.mxu0 0.0
    %256 = vmatpush1.msra.mxu0 0.0
    %257 = vmatprep.subr.mxu0 0.0
    %258 = vmatpush1.msra.mxu0 0.0
    %259 = vmatprep.subr.mxu0 0.0
    %260 = vmatpush1.msra.mxu0 0.0
    %261 = vmatprep.subr.mxu0 0.0
    %262 = vmatpush1.msra.mxu0 0.0
    %263 = vmatprep.subr.mxu0 0.0
    %264 = vmatpush1.msra.mxu0 0.0
    %265 = vmatprep.subr.mxu0 0.0
    %266 = vmatpush1.msra.mxu0 0.0
    %267 = vmatprep.subr.mxu0 0.0
    %268 = vmatpush1.msra.mxu0 0.0
    %269 = vmatprep.subr.mxu0 0.0
    %270 = vmatpush1.msra.mxu0 0.0
    %271 = vmatprep.subr.mxu0 0.0
    %272 = vmatpush1.msra.mxu0 0.0
    %273 = vmatprep.subr.mxu0 0.0
    %274 = vmatpush1.msra.mxu0 0.0
    %275 = vmatprep.subr.mxu0 0.0
    %276 = vmatpush1.msra.mxu0 0.0
    %277 = vmatprep.subr.mxu0 0.0
    %278 = vmatpush1.msra.mxu0 0.0
    %279 = vmatprep.subr.mxu0 0.0
    %280 = vmatpush1.msra.mxu0 0.0
    %281 = vmatprep.subr.mxu0 0.0
    %282 = vmatpush1.msra.mxu0 0.0
    %283 = vmatprep.subr.mxu0 0.0
    %284 = vmatpush1.msra.mxu0 0.0
    %285 = vmatprep.mubr.f32.mxu0 0.0
    %286 = vmatmul.mubr.f32.gmra.mrb[0].mxu0 %v196
    %v287 = vpop.f32.mrb[0].mxu0
    %v288 = vadd.f32 %v219, %v287
    %v289 = vpop.f32.mrb[0].mxu0
    %290 = vmatprep.mubr.f32.mxu0 0.0
    %291 = vmatmul.mubr.f32.gmra.mrb[0].mxu0 %v197
    %v292 = vpop.f32.mrb[0].mxu0
    %v293 = vadd.f32 %v219, %v292
    %v294 = vpop.f32.mrb[0].mxu0
    %295 = vdwg.mxu0
    %296 = vst.msk [vmem:[#allocation11] sm:$0xff] %vm98, %v288
    %297 = vst.msk [vmem:[#allocation11 + $0x8] sm:$0xff] %vm98, %v293
    // Predicated region
    $region42: #{tpu_custom_call.1} parent=1 // pred_check
      _
    $region43: #{tpu_custom_call.1} parent=1 // pred_check_branch
      %299 = sbr.rel (0) target = $region45
    $region44: #{tpu_custom_call.1} parent=1 // pred_region
      %s301 = ssub.s32 256, 256
      %302 = vsyncadd [#allocation4], %s301
      %s303 = sshll.u32 [#allocation11], 4
      %s304 = int_to_ptr.vmem [resolvable:$true] %s303
      %309 = dma.vmem_to_hbm [thread:$0]  %s304, 256, %s5, [#allocation4], 128, 128, 8
    $region45: #{tpu_custom_call.1} parent=1 // pred_fallthru
      _
    // Predicated region
    $region46: #{tpu_custom_call.1} parent=1 // pred_check
      _
    $region47: #{tpu_custom_call.1} parent=1 // pred_check_branch
      %311 = sbr.rel (0) target = $region49
    $region48: #{tpu_custom_call.1} parent=1 // pred_region
      %312 = dma.done [#allocation4], 256
    $region49: #{tpu_custom_call.1} parent=1 // pred_fallthru
      _
    %313 = vsyncpa [#allocation3], 1
    %314 = vsyncpa [#allocation6], 1
    %315 = vsyncpa [#allocation9], 1
    %316 = vsyncpa [#allocation4], 1

</llo_original>
